<compile_context>
chip_gen: v7x
topology: tpu7x:2x2x1
jax: 0.10.0
libtpu: 0.0.40
codegen_flags: <defaults>
</compile_context>

<pallas_src>
import jax
import jax.numpy as jnp
from jax import lax
from jax.experimental import pallas as pl
from jax.experimental.pallas import tpu as pltpu


def _fps_kernel(x_ref, o_ref):
    """x_ref: (1, C, N) block, o_ref: (1, C, S) block for one batch element."""
    x = x_ref[0].astype(jnp.float32)                # (C, N), f32 accumulation
    C, N = x.shape
    S = o_ref.shape[2]

    iota_n = lax.broadcasted_iota(jnp.int32, (1, N), 1)    # (1, N)
    iota_s = lax.broadcasted_iota(jnp.int32, (1, S), 1)    # (1, S)

    def body(s, carry):
        dist, farthest, centers = carry             # (1,N) f32, (1,1) i32, (C,S) f32
        # Coordinates of point `farthest`: one-hot mask + cross-lane sum
        # (avoids a dynamic lane index).
        sel = iota_n == farthest                                         # (1, N)
        point = jnp.sum(jnp.where(sel, x, 0.0), axis=1, keepdims=True)   # (C, 1)
        # Record this center in column s (one-hot write, no dynamic store).
        centers = centers + jnp.where(iota_s == s, point, 0.0)           # (C, S)
        # Update running min squared distance to the selected set.
        d = jnp.sum((x - point) ** 2, axis=0, keepdims=True)             # (1, N)
        dist = jnp.minimum(dist, d)
        # Next farthest = argmax(dist), first occurrence on ties.
        m = jnp.max(dist, axis=1, keepdims=True)                         # (1, 1)
        cand = jnp.where(dist == m, iota_n, N)                           # (1, N)
        farthest = jnp.min(cand, axis=1, keepdims=True)                  # (1, 1)
        return dist, farthest, centers

    dist0 = jnp.full((1, N), 1e10, jnp.float32)
    far0 = jnp.zeros((1, 1), jnp.int32)             # first center = point 0
    cen0 = jnp.zeros((C, S), jnp.float32)
    _, _, centers = lax.fori_loop(0, S, body, (dist0, far0, cen0))

    o_ref[0] = centers.astype(o_ref.dtype)          # single dense (C, S) store


def downsample(xyz: jax.Array, center_num: int) -> jax.Array:
    """xyz: (B, N, 3) -> (B, center_num, 3) farthest-point-sampled centers."""
    B, N, C = xyz.shape
    S = int(center_num)

    # Lane-dense layout: big point axis N on the 128-lane (last) axis.
    x_t = jnp.transpose(xyz, (0, 2, 1))             # (B, C, N)

    out_t = pl.pallas_call(
        _fps_kernel,
        out_shape=jax.ShapeDtypeStruct((B, C, S), xyz.dtype),
        grid_spec=pl.GridSpec(
            grid=(B,),
            in_specs=[pl.BlockSpec((1, C, N), lambda b: (b, 0, 0))],
            out_specs=pl.BlockSpec((1, C, S), lambda b: (b, 0, 0)),
        ),
        compiler_params=pltpu.CompilerParams(
            dimension_semantics=("parallel",),       # batches split across TCs on v7x
        ),
    )(x_t)

    return jnp.transpose(out_t, (0, 2, 1))          # (B, S, C)


def downsample_ref(xyz: jax.Array, center_num: int) -> jax.Array:
    """Pure-JAX reference: standard PointNet++ FPS (first index 0) + gather."""
    B, N, C = xyz.shape

    def per_batch(pts):
        pts32 = pts.astype(jnp.float32)

        def body(s, carry):
            dist, farthest, idxs = carry
            idxs = idxs.at[s].set(farthest)
            centroid = pts32[farthest]
            d = jnp.sum((pts32 - centroid) ** 2, axis=-1)
            dist = jnp.minimum(dist, d)
            farthest = jnp.argmax(dist).astype(jnp.int32)
            return dist, farthest, idxs

        dist0 = jnp.full((N,), 1e10, jnp.float32)
        idxs0 = jnp.zeros((center_num,), jnp.int32)
        _, _, idxs = lax.fori_loop(0, center_num, body,
                                   (dist0, jnp.int32(0), idxs0))
        return pts[idxs]

    return jax.vmap(per_batch)(xyz)


if __name__ == "__main__":
    key = jax.random.PRNGKey(0)
    # xyz: (batch=2, points=64, coords=3); sample center_num=16 centers.
    B, N, C = 2, 64, 3
    center_num = 16
    xyz = jax.random.normal(key, (B, N, C), dtype=jnp.float32)

    out = downsample(xyz, center_num)
    out = jax.block_until_ready(out)

    ref = downsample_ref(xyz, center_num)
    assert out.shape == (B, center_num, C), out.shape
    assert jnp.allclose(out, ref, atol=1e-5, rtol=1e-5), "mismatch vs reference"

    print("KERNEL_OK")
</pallas_src>

<mosaic_0001>
module attributes {stable_mosaic.version = 11 : i64} {
  func.func @_fps_kernel(%arg0: i32, %arg1: memref<1x3x64xf32, #tpu.memory_space<vmem>>, %arg2: memref<1x3x16xf32, #tpu.memory_space<vmem>>) attributes {dimension_semantics = [#tpu.dimension_semantics<parallel>], iteration_bounds = array<i64: 2>, scalar_prefetch = 0 : i64, scratch_operands = 0 : i64, tpu.core_type = #tpu.core_type<tc>, window_params = [{transform_indices = @transform_0, window_bounds = array<i64: 1, 3, 64>}, {transform_indices = @transform_1, window_bounds = array<i64: 1, 3, 16>}]} {
    %c0 = arith.constant 0 : index
    %c0_0 = arith.constant 0 : index
    %c0_1 = arith.constant 0 : index
    %0 = vector.load %arg1[%c0, %c0_0, %c0_1] : memref<1x3x64xf32, #tpu.memory_space<vmem>>, vector<1x3x64xf32>
    %1 = vector.shape_cast %0 : vector<1x3x64xf32> to vector<3x64xf32>
    %2 = tpu.iota {dimensions = array<i32: 1>} : vector<1x64xi32>
    %3 = tpu.iota {dimensions = array<i32: 1>} : vector<1x16xi32>
    %cst = arith.constant 1.000000e+10 : f32
    %4 = vector.broadcast %cst : f32 to vector<1x64xf32>
    %c0_i32 = arith.constant 0 : i32
    %5 = vector.broadcast %c0_i32 : i32 to vector<1x1xi32>
    %cst_2 = arith.constant 0.000000e+00 : f32
    %6 = vector.broadcast %cst_2 : f32 to vector<3x16xf32>
    %c0_i32_3 = arith.constant 0 : i32
    %c16_i32 = arith.constant 16 : i32
    %7 = arith.addi %c0_i32_3, %c16_i32 : i32
    %c1_i32 = arith.constant 1 : i32
    %8:3 = scf.for %arg3 = %c0_i32_3 to %7 step %c1_i32 iter_args(%arg4 = %4, %arg5 = %5, %arg6 = %6) -> (vector<1x64xf32>, vector<1x1xi32>, vector<3x16xf32>)  : i32 {
      %12 = vector.broadcast %arg5 : vector<1x1xi32> to vector<1x64xi32>
      %13 = arith.cmpi eq, %2, %12 : vector<1x64xi32>
      %cst_8 = arith.constant 0.000000e+00 : f32
      %14 = vector.shape_cast %13 : vector<1x64xi1> to vector<1x64xi1>
      %15 = vector.broadcast %14 : vector<1x64xi1> to vector<3x64xi1>
      %16 = vector.broadcast %cst_8 : f32 to vector<3x64xf32>
      %17 = arith.select %15, %1, %16 : vector<3x64xi1>, vector<3x64xf32>
      %cst_9 = arith.constant dense<0.000000e+00> : vector<3xf32>
      %18 = vector.multi_reduction <add>, %17, %cst_9 [1] : vector<3x64xf32> to vector<3xf32>
      %19 = vector.shape_cast %18 : vector<3xf32> to vector<3x1xf32>
      %20 = vector.broadcast %arg3 : i32 to vector<1x16xi32>
      %21 = arith.cmpi eq, %3, %20 : vector<1x16xi32>
      %cst_10 = arith.constant 0.000000e+00 : f32
      %22 = vector.shape_cast %21 : vector<1x16xi1> to vector<1x16xi1>
      %23 = vector.broadcast %22 : vector<1x16xi1> to vector<3x16xi1>
      %24 = vector.shape_cast %19 : vector<3x1xf32> to vector<3x1xf32>
      %25 = vector.broadcast %24 : vector<3x1xf32> to vector<3x16xf32>
      %26 = vector.broadcast %cst_10 : f32 to vector<3x16xf32>
      %27 = arith.select %23, %25, %26 : vector<3x16xi1>, vector<3x16xf32>
      %28 = arith.addf %arg6, %27 : vector<3x16xf32>
      %29 = vector.broadcast %19 : vector<3x1xf32> to vector<3x64xf32>
      %30 = arith.subf %1, %29 : vector<3x64xf32>
      %31 = arith.mulf %30, %30 : vector<3x64xf32>
      %cst_11 = arith.constant dense<0.000000e+00> : vector<64xf32>
      %32 = vector.multi_reduction <add>, %31, %cst_11 [0] : vector<3x64xf32> to vector<64xf32>
      %33 = vector.shape_cast %32 : vector<64xf32> to vector<1x64xf32>
      %34 = arith.minimumf %arg4, %33 : vector<1x64xf32>
      %cst_12 = arith.constant dense<0xFF800000> : vector<1xf32>
      %35 = vector.multi_reduction <maximumf>, %34, %cst_12 [1] : vector<1x64xf32> to vector<1xf32>
      %36 = vector.shape_cast %35 : vector<1xf32> to vector<1x1xf32>
      %37 = vector.broadcast %36 : vector<1x1xf32> to vector<1x64xf32>
      %38 = arith.cmpf oeq, %34, %37 : vector<1x64xf32>
      %c64_i32 = arith.constant 64 : i32
      %39 = vector.broadcast %c64_i32 : i32 to vector<1x64xi32>
      %40 = arith.select %38, %2, %39 : vector<1x64xi1>, vector<1x64xi32>
      %cst_13 = arith.constant dense<2147483647> : vector<1xi32>
      %41 = vector.multi_reduction <minsi>, %40, %cst_13 [1] : vector<1x64xi32> to vector<1xi32>
      %42 = vector.shape_cast %41 : vector<1xi32> to vector<1x1xi32>
      scf.yield %34, %42, %28 : vector<1x64xf32>, vector<1x1xi32>, vector<3x16xf32>
    }
    %c16_i32_4 = arith.constant 16 : i32
    %c0_5 = arith.constant 0 : index
    %c0_6 = arith.constant 0 : index
    %c0_7 = arith.constant 0 : index
    %9 = vector.load %arg2[%c0_5, %c0_6, %c0_7] : memref<1x3x16xf32, #tpu.memory_space<vmem>>, vector<1x3x16xf32>
    %10 = vector.shape_cast %9 : vector<1x3x16xf32> to vector<3x16xf32>
    %11 = vector.shape_cast %8#2 : vector<3x16xf32> to vector<1x3x16xf32>
    tpu.vector_store %arg2[%c0_5, %c0_6, %c0_7], %11 {strides = array<i32>} : memref<1x3x16xf32, #tpu.memory_space<vmem>>, vector<1x3x16xf32>,
    return
  }
  func.func @transform_0(%arg0: i32) -> (i32, i32, i32) {
    %c0_i32 = arith.constant 0 : i32
    %c0_i32_0 = arith.constant 0 : i32
    %c0_i32_1 = arith.constant 0 : i32
    return %arg0, %c0_i32, %c0_i32_0 : i32, i32, i32
  }
  func.func @transform_1(%arg0: i32) -> (i32, i32, i32) {
    %c0_i32 = arith.constant 0 : i32
    %c0_i32_0 = arith.constant 0 : i32
    %c0_i32_1 = arith.constant 0 : i32
    return %arg0, %c0_i32, %c0_i32_0 : i32, i32, i32
  }
}

</mosaic_0001>

<llo_original>
// kernel: tpu_custom_call.1
$region0: #{tpu_custom_call.1}
  #allocation0 [shape = 'u32[]', space=smem, size = 0x4, offset = 0x4, fixed_abs, tag = 'smem constant byte address 0x4 - core index']
  #allocation1 [shape = 'u32[144,128]{1,0:T(1,128)}', space=vmem, size = 0x12000, scoped, tag = 'internal scratch']
  %s0 = inlined_call_operand.vmem [shape: f32[2,3,64], index: 0, kind: input, shape index: {}]
  %s1 = inlined_call_operand.vmem [shape: f32[2,3,16], index: 1, kind: output, shape index: {}]
  %s2 = sld [smem:[#allocation0]]
  $region44: #{tpu_custom_call.1} parent=0
    _
  %s4 = ssub.s32 1, %s2
  %s5 = scalar_select 0, %s4, %s2
  loop: start=0, step=1, limit=4
  $region2: #{tpu_custom_call.1} parent=0 // loop_pre_header
    _
  $region3: #{tpu_custom_call.1} parent=0 // loop_header
    %s7 = sphi 0, %s11
    %p8 = scmp.ge.s32.totalorder %s7, 4
    %s17 = sphi 0, %s19
    %s20 = sphi 0, %s17
    %s21 = sphi 0, %s20
    %s37 = sphi 0, %s21
    %s43 = sphi 0, %s45
    %s46 = sphi 0, %s43
    %s47 = sphi 0, %s46
    %s63 = sphi 0, %s47
  $region4: #{tpu_custom_call.1} parent=0 // loop_header_branch
    %10 = sbr.rel (%p8) target = $region8
  $region5: #{tpu_custom_call.1} parent=0 // loop_body
    %s12 = ssub.s32 %s7, 1
    %s13 = ssub.s32 %s7, 2
    %s14 = sadd.s32 %s7, 1
    %s15 = ssub.s32 %s7, %s14
    %p16 = scmp.eq.s32.totalorder %s15, 0
    %s18 = sadd.s32 %s17, 1
    %s19 = scalar_select %p16, %s17, %s18
    %p22 = pneg %p16
    %p23 = scmp.eq.s32.totalorder %s7, 1
    %p24 = por %p22, %p23
    %p25 = scmp.ne.s32.totalorder %s17, %s20
    %p26 = scmp.eq.s32.totalorder %s7, 0
    %p27 = por %p25, %p26
    %p28 = scmp.ne.s32.totalorder %s17, %s20
    %p29 = scmp.eq.s32.totalorder %s12, 1
    %p30 = por %p28, %p29
    %p31 = scmp.ne.s32.totalorder %s20, %s21
    %p32 = scmp.eq.s32.totalorder %s12, 0
    %p33 = por %p31, %p32
    %p34 = scmp.ne.s32.totalorder %s20, %s21
    %p35 = scmp.eq.s32.totalorder %s13, 1
    %p36 = por %p34, %p35
    %p38 = scmp.ne.s32.totalorder %s21, %s37
    %p39 = scmp.eq.s32.totalorder %s13, 0
    %p40 = por %p38, %p39
    %s41 = ssub.s32 %s7, %s14
    %p42 = scmp.eq.s32.totalorder %s41, 0
    %s44 = sadd.s32 %s43, 1
    %s45 = scalar_select %p42, %s43, %s44
    %p48 = pneg %p42
    %p49 = scmp.eq.s32.totalorder %s7, 1
    %p50 = por %p48, %p49
    %p51 = scmp.ne.s32.totalorder %s43, %s46
    %p52 = scmp.eq.s32.totalorder %s7, 0
    %p53 = por %p51, %p52
    %p54 = scmp.ne.s32.totalorder %s43, %s46
    %p55 = scmp.eq.s32.totalorder %s12, 1
    %p56 = por %p54, %p55
    %p57 = scmp.ne.s32.totalorder %s46, %s47
    %p58 = scmp.eq.s32.totalorder %s12, 0
    %p59 = por %p57, %p58
    %p60 = scmp.ne.s32.totalorder %s46, %s47
    %p61 = scmp.eq.s32.totalorder %s13, 1
    %p62 = por %p60, %p61
    %p64 = scmp.ne.s32.totalorder %s47, %s63
    %p65 = scmp.eq.s32.totalorder %s13, 0
    %p66 = por %p64, %p65
    %p67 = scmp.le.s32.totalorder 1, %s7
    %p68 = scmp.lt.s32.totalorder %s7, 3
    %p69 = pnand %p67, %p68
    %p70 = pneg %p69
    // Predicated region
    $region9: #{tpu_custom_call.1} parent=5 // pred_check
      _
    $region10: #{tpu_custom_call.1} parent=5 // pred_check_branch
      %72 = sbr.rel (%p69) target = $region12
    $region11: #{tpu_custom_call.1} parent=5 // pred_region
      %s73 = ssub.s32 %s7, 1
    $region12: #{tpu_custom_call.1} parent=5 // pred_fallthru
      _
    %p74 = scmp.lt.s32.totalorder %s7, 2
    // Predicated region
    $region13: #{tpu_custom_call.1} parent=5 // pred_check
      %p75 = pneg %p74
    $region14: #{tpu_custom_call.1} parent=5 // pred_check_branch
      %77 = sbr.rel (%p75) target = $region16
    $region15: #{tpu_custom_call.1} parent=5 // pred_region
      // Predicated region
      $region17: #{tpu_custom_call.1} parent=15 // pred_check
        %p78 = pneg %p27
      $region18: #{tpu_custom_call.1} parent=15 // pred_check_branch
        %80 = sbr.rel (%p78) target = $region20
      $region19: #{tpu_custom_call.1} parent=15 // pred_region
        %p81 = scmp.lt.s32.totalorder %s7, 1
        %s82 = scalar_select %p81, %s7, 1
        %s83 = smul.addr %s82, 4
        %s84 = scalar_lea.vmem %s0, %s83
      $region20: #{tpu_custom_call.1} parent=15 // pred_fallthru
        _
    $region16: #{tpu_custom_call.1} parent=5 // pred_fallthru
      _
    %p85 = scmp.le.s32.totalorder 1, %s7
    %p86 = scmp.lt.s32.totalorder %s7, 3
    %p87 = pnand %p85, %p86
    %p88 = pneg %p87
    // Predicated region
    $region21: #{tpu_custom_call.1} parent=5 // pred_check
      _
    $region22: #{tpu_custom_call.1} parent=5 // pred_check_branch
      %90 = sbr.rel (%p87) target = $region24
    $region23: #{tpu_custom_call.1} parent=5 // pred_region
      %s91 = ssub.s32 %s7, 1
      %p92 = scmp.lt.s32.totalorder %s12, 1
      %s93 = scalar_select %p92, %s12, 1
      %s94 = smul.addr %s93, 4
      %s95 = scalar_lea.vmem %s0, %s94
      %p96 = pneg %p33
      %p97 = pneg %p30
      %p98 = pneg %p59
      %p99 = pneg %p56
      %p100 = scmp.lt.s32.totalorder %s12, 1
      %s101 = scalar_select %p100, %s12, 1
      %s102 = smul.addr %s101, 4
      %s103 = scalar_lea.vmem %s1, %s102
      %p104 = scmp.lt.s32.totalorder %s12, 1
      %s105 = scalar_select %p104, %s12, 1
      %s106 = smul.addr %s105, 4
      %s107 = scalar_lea.vmem %s0, %s106
      %p108 = scmp.lt.s32.totalorder %s12, 1
      %s109 = scalar_select %p108, %s12, 1
      %s110 = smul.addr %s109, 4
      %s111 = scalar_lea.vmem %s1, %s110
      %v112 = vld [vmem:[%s107] sm:$0x7]
      %v113 = vlaneseq
      %v114 = vand.u32 %v113, 127
      loop: start=0, step=1, limit=16
      $region25: #{tpu_custom_call.1} parent=23 // loop_pre_header
        _
      $region26: #{tpu_custom_call.1} parent=23 // loop_header
        %s116 = sphi 0, %s120
        %p117 = scmp.ge.s32.totalorder %s116, 16
        %v121 = vphi 1e+10, %v147
        %v122 = vphi 0, %v168
        %v123 = vphi 0.0, %v137
      $region27: #{tpu_custom_call.1} parent=23 // loop_header_branch
        %119 = sbr.rel (%p117) target = $region31
      $region28: #{tpu_custom_call.1} parent=23 // loop_body
        %vm124 = vcmp.eq.s32.totalorder %v114, %v122
        %v125 = vsel %vm124, 1, 0
        %vm126 = vcmp.eq.s32.totalorder %v125, 1
        %v127 = vsel %vm126, %v112, 0.0
        %vm128 = vcmask 518144
        %v129 = vsel %vm128, %v127, 0.0
        %130 = vadd.xlane.f32.xlu0 %v129
        %v131 = vpop.xlane.xlu0 %130
        %v132 = vstv %s116
        %vm133 = vcmp.eq.s32.totalorder %v114, %v132
        %v134 = vsel %vm133, 1, 0
        %vm135 = vcmp.eq.s32.totalorder %v134, 1
        %v136 = vsel %vm135, %v131, 0.0
        %v137 = vadd.f32 %v123, %v136
        %v138 = vsub.f32 %v112, %v131
        %v139 = vmul.f32 %v138, %v138
        %v140 = vsel %vm128, %v139, 0.0
        %v141 = vrot.slane %v140, 4
        %v142 = vadd.f32 %v140, %v141
        %v143 = vrot.slane %v142, 2
        %v144 = vadd.f32 %v142, %v143
        %v145 = vrot.slane %v144, 1
        %v146 = vadd.f32 %v144, %v145
        %v147 = vmin.f32 %v121, %v146
        %vm148 = vcmask 523264
        %v149 = vsel %vm148, %v147, -inf
        %150 = vmax.xlane.f32.xlu0 %v149
        %v151 = vpop.xlane.xlu0 %150
        %vm152 = vcmp.eq.f32.partialorder %v147, %v151
        %v153 = vsel %vm152, %v114, 64
        %v154 = vsel %vm148, %v153, 2147483647
        %v155 = vand.u32 %v154, 65535
        %v156 = vshra.s32 %v154, 16
        %v157 = vcvt.s32.f32 %v155
        %v158 = vcvt.s32.f32 %v156
        %159 = vmin.xlane.f32.xlu0 %v158
        %v160 = vpop.xlane.xlu0 %159
        %vm161 = vcmp.eq.f32.partialorder %v158, %v160
        %v162 = vsel %vm161, %v157, inf
        %163 = vmin.xlane.f32.xlu0 %v162
        %v164 = vpop.xlane.xlu0 %163
        %v165 = vcvt.f32.s32 %v164
        %v166 = vcvt.f32.s32 %v160
        %v167 = vshll.u32 %v166, 16
        %v168 = vadd.s32 %v167, %v165
      $region29: #{tpu_custom_call.1} parent=23 // loop_footer
        %s120 = sadd.s32 1, %s116
      $region30: #{tpu_custom_call.1} parent=23 // loop_footer_branch
        %115 = sbr.rel target = $region26
      $region31: #{tpu_custom_call.1} parent=23 // loop_exit
        _
      %vm169 = vcmask 124928
      %170 = vst.msk [vmem:[%s111] sm:$0x7] %vm169, %v123
      %p171 = scmp.lt.s32.totalorder %s12, 1
      %s172 = scalar_select %p171, %s12, 1
      %s173 = smul.addr %s172, 4
      %s174 = scalar_lea.vmem %s1, %s173
      // Predicated region
      $region32: #{tpu_custom_call.1} parent=23 // pred_check
        %p175 = pneg %p56
      $region33: #{tpu_custom_call.1} parent=23 // pred_check_branch
        %177 = sbr.rel (%p175) target = $region35
      $region34: #{tpu_custom_call.1} parent=23 // pred_region
        _
      $region35: #{tpu_custom_call.1} parent=23 // pred_fallthru
        _
    $region24: #{tpu_custom_call.1} parent=5 // pred_fallthru
      _
    %p178 = scmp.le.s32.totalorder 2, %s7
    // Predicated region
    $region36: #{tpu_custom_call.1} parent=5 // pred_check
      %p179 = pneg %p178
    $region37: #{tpu_custom_call.1} parent=5 // pred_check_branch
      %181 = sbr.rel (%p179) target = $region39
    $region38: #{tpu_custom_call.1} parent=5 // pred_region
      %s182 = ssub.s32 %s7, 2
      // Predicated region
      $region40: #{tpu_custom_call.1} parent=38 // pred_check
        %p183 = pneg %p62
      $region41: #{tpu_custom_call.1} parent=38 // pred_check_branch
        %185 = sbr.rel (%p183) target = $region43
      $region42: #{tpu_custom_call.1} parent=38 // pred_region
        %p186 = scmp.lt.s32.totalorder %s13, 1
        %s187 = scalar_select %p186, %s13, 1
        %s188 = smul.addr %s187, 4
        %s189 = scalar_lea.vmem %s1, %s188
      $region43: #{tpu_custom_call.1} parent=38 // pred_fallthru
        _
    $region39: #{tpu_custom_call.1} parent=5 // pred_fallthru
      _
  $region6: #{tpu_custom_call.1} parent=0 // loop_footer
    %s11 = sadd.s32 1, %s7
  $region7: #{tpu_custom_call.1} parent=0 // loop_footer_branch
    %6 = sbr.rel target = $region3
  $region8: #{tpu_custom_call.1} parent=0 // loop_exit
    _

</llo_original>
